<compile_context>
chip_gen: v7x
topology: tpu7x:2x2x1
jax: 0.10.0
libtpu: 0.0.40
codegen_flags: <defaults>
</compile_context>

<pallas_src>
import math

import jax
import jax.numpy as jnp
from jax.experimental import pallas as pl
from jax.experimental.pallas import tpu as pltpu

FEAT = 128          # lane-dense feature width (all layer dims zero-padded to this)
N_LAYERS = 4
TB_MAX = 512        # batch-tile cap (multiple of 8 sublanes, tiny VMEM footprint)


def _round_up(n, m):
    return ((n + m - 1) // m) * m


# ----------------------------- Pallas kernel ------------------------------- #
def _fc_model_kernel(x_ref, w_ref, b_ref, o_ref):
    # x_ref: [TB, 128]   w_ref: [4, 128, 128]   b_ref: [4, 128]   o_ref: [TB, 128]
    h = x_ref[...]
    # Linear -> ReLU, three times (static unroll; slab slices are free views).
    for layer in range(N_LAYERS - 1):
        h = jnp.dot(h, w_ref[layer], preferred_element_type=jnp.float32) + b_ref[layer]
        h = jnp.maximum(h, 0.0)
    # Output layer (no activation), lane-dense unmasked store.
    o_ref[...] = (
        jnp.dot(h, w_ref[N_LAYERS - 1], preferred_element_type=jnp.float32)
        + b_ref[N_LAYERS - 1]
    )


# ------------------------------- wrapper ------------------------------------ #
def pack_fc_model_params(params):
    """Pack per-layer (w[i], b[i]) into two zero-padded VMEM slabs."""
    w_slab = jnp.zeros((N_LAYERS, FEAT, FEAT), jnp.float32)
    b_slab = jnp.zeros((N_LAYERS, FEAT), jnp.float32)
    for i in range(N_LAYERS):
        w = params[f"w{i + 1}"]              # [in, out]
        b = params[f"b{i + 1}"].reshape(-1)  # [out]
        w_slab = w_slab.at[i, : w.shape[0], : w.shape[1]].set(w)
        b_slab = b_slab.at[i, : b.shape[0]].set(b)
    return {"w": w_slab, "b": b_slab}


def fc_model_forward(x, packed, out_size):
    """x: [B, input_size] float32; packed: dict from pack_fc_model_params."""
    B, in_size = x.shape

    # Batch tiling: multiple of 8 sublanes, capped so the tile stays small.
    b_pad = _round_up(max(B, 1), 8)
    tb = min(TB_MAX, b_pad)
    b_pad = _round_up(b_pad, tb)

    # Lane-dense, zero-padded input slab [b_pad, 128].
    x_pad = jnp.zeros((b_pad, FEAT), jnp.float32).at[:B, :in_size].set(x)

    out = pl.pallas_call(
        _fc_model_kernel,
        out_shape=jax.ShapeDtypeStruct((b_pad, FEAT), jnp.float32),
        grid_spec=pltpu.PrefetchScalarGridSpec(
            num_scalar_prefetch=0,
            grid=(b_pad // tb,),
            in_specs=[
                pl.BlockSpec((tb, FEAT), lambda i: (i, 0)),                  # x tile
                pl.BlockSpec((N_LAYERS, FEAT, FEAT), lambda i: (0, 0, 0)),   # weights (resident)
                pl.BlockSpec((N_LAYERS, FEAT), lambda i: (0, 0)),            # biases (resident)
            ],
            out_specs=pl.BlockSpec((tb, FEAT), lambda i: (i, 0)),
        ),
        compiler_params=pltpu.CompilerParams(
            dimension_semantics=("parallel",),   # shard batch tiles across TCs on v7x
        ),
    )(x_pad, packed["w"], packed["b"])

    return out[:B, :out_size]


# --------------------------- parameter init --------------------------------- #
def _xavier_uniform(key, fan_in, fan_out):
    """Matches nn.init.xavier_uniform_ on a [out, in] weight; returned as [in, out]."""
    bound = math.sqrt(6.0 / (fan_in + fan_out))
    w_torch = jax.random.uniform(key, (fan_out, fan_in), jnp.float32, -bound, bound)
    return w_torch.T  # store as [in, out] for x @ W


def _linear_bias(key, fan_in, fan_out):
    """Matches PyTorch default Linear bias init: U(-1/sqrt(fan_in), 1/sqrt(fan_in))."""
    bound = 1.0 / math.sqrt(fan_in)
    return jax.random.uniform(key, (1, fan_out), jnp.float32, -bound, bound)


def init_fc_model_params(key, input_size, output_size, hidden=16):
    keys = jax.random.split(key, 8)
    dims = [(input_size, hidden), (hidden, hidden), (hidden, hidden), (hidden, output_size)]
    params = {}
    for i, (fi, fo) in enumerate(dims, start=1):
        params[f"w{i}"] = _xavier_uniform(keys[2 * (i - 1)], fi, fo)
        params[f"b{i}"] = _linear_bias(keys[2 * (i - 1) + 1], fi, fo)
    return params


# ------------------------------ reference ----------------------------------- #
def fc_model_reference(x, params):
    h = jnp.maximum(x @ params["w1"] + params["b1"], 0.0)
    h = jnp.maximum(h @ params["w2"] + params["b2"], 0.0)
    h = jnp.maximum(h @ params["w3"] + params["b3"], 0.0)
    return h @ params["w4"] + params["b4"]


if __name__ == "__main__":
    # CartPole: observation dim = 4, action dim = 2.
    INPUT_SIZE = 4
    OUTPUT_SIZE = 2

    key = jax.random.PRNGKey(0)
    pkey, xkey_small, xkey_big = jax.random.split(key, 3)

    params = init_fc_model_params(pkey, INPUT_SIZE, OUTPUT_SIZE)
    packed = pack_fc_model_params(params)

    # Online-policy-sized batch (B=2) ...
    x_small = jax.random.normal(xkey_small, (2, INPUT_SIZE), jnp.float32)
    out_small = jax.block_until_ready(fc_model_forward(x_small, packed, OUTPUT_SIZE))
    ref_small = fc_model_reference(x_small, params)
    assert out_small.shape == (2, OUTPUT_SIZE)
    assert jnp.allclose(out_small, ref_small, atol=1e-4, rtol=1e-4), \
        "Pallas output mismatch vs reference (B=2)"

    # ... and a training-minibatch-sized batch to exercise the batched grid (2 tiles).
    x_big = jax.random.normal(xkey_big, (1024, INPUT_SIZE), jnp.float32)
    out_big = jax.block_until_ready(fc_model_forward(x_big, packed, OUTPUT_SIZE))
    ref_big = fc_model_reference(x_big, params)
    assert out_big.shape == (1024, OUTPUT_SIZE)
    assert jnp.allclose(out_big, ref_big, atol=1e-4, rtol=1e-4), \
        "Pallas output mismatch vs reference (B=1024)"

    print("KERNEL_OK")
</pallas_src>

<mosaic_0001>
module attributes {stable_mosaic.version = 11 : i64} {
  func.func @_fc_model_kernel(%arg0: i32, %arg1: memref<8x128xf32, #tpu.memory_space<vmem>>, %arg2: memref<4x128x128xf32, #tpu.memory_space<vmem>>, %arg3: memref<4x128xf32, #tpu.memory_space<vmem>>, %arg4: memref<8x128xf32, #tpu.memory_space<vmem>>) attributes {dimension_semantics = [#tpu.dimension_semantics<parallel>], iteration_bounds = array<i64: 1>, scalar_prefetch = 0 : i64, scratch_operands = 0 : i64, tpu.core_type = #tpu.core_type<tc>, window_params = [{transform_indices = @transform_0, window_bounds = array<i64: 8, 128>}, {pipeline_mode = #tpu.pipeline_mode<synchronous>, transform_indices = @transform_1, window_bounds = array<i64: 4, 128, 128>}, {pipeline_mode = #tpu.pipeline_mode<synchronous>, transform_indices = @transform_2, window_bounds = array<i64: 4, 128>}, {transform_indices = @transform_3, window_bounds = array<i64: 8, 128>}]} {
    %c0 = arith.constant 0 : index
    %c0_0 = arith.constant 0 : index
    %0 = vector.load %arg1[%c0, %c0_0] : memref<8x128xf32, #tpu.memory_space<vmem>>, vector<8x128xf32>
    %c0_1 = arith.constant 0 : index
    %c0_2 = arith.constant 0 : index
    %c0_3 = arith.constant 0 : index
    %1 = vector.load %arg2[%c0_1, %c0_2, %c0_3] : memref<4x128x128xf32, #tpu.memory_space<vmem>>, vector<1x128x128xf32>
    %2 = vector.shape_cast %1 : vector<1x128x128xf32> to vector<128x128xf32>
    %cst = arith.constant dense<0.000000e+00> : vector<8x128xf32>
    %3 = tpu.matmul %0, %2, %cst {dimension_numbers = #tpu.dot_dimension_numbers<[1], [0], [0], [1], [0, 0, 1, 1], [], []>} : vector<8x128xf32>, vector<128x128xf32>, vector<8x128xf32> -> vector<8x128xf32>
    %c0_4 = arith.constant 0 : index
    %c0_5 = arith.constant 0 : index
    %4 = vector.load %arg3[%c0_4, %c0_5] : memref<4x128xf32, #tpu.memory_space<vmem>>, vector<1x128xf32>
    %5 = vector.shape_cast %4 : vector<1x128xf32> to vector<128xf32>
    %6 = vector.shape_cast %5 : vector<128xf32> to vector<1x128xf32>
    %7 = vector.broadcast %6 : vector<1x128xf32> to vector<8x128xf32>
    %8 = arith.addf %3, %7 : vector<8x128xf32>
    %cst_6 = arith.constant 0.000000e+00 : f32
    %9 = vector.broadcast %cst_6 : f32 to vector<8x128xf32>
    %10 = arith.maximumf %8, %9 : vector<8x128xf32>
    %c1 = arith.constant 1 : index
    %c0_7 = arith.constant 0 : index
    %c0_8 = arith.constant 0 : index
    %11 = vector.load %arg2[%c1, %c0_7, %c0_8] : memref<4x128x128xf32, #tpu.memory_space<vmem>>, vector<1x128x128xf32>
    %12 = vector.shape_cast %11 : vector<1x128x128xf32> to vector<128x128xf32>
    %cst_9 = arith.constant dense<0.000000e+00> : vector<8x128xf32>
    %13 = tpu.matmul %10, %12, %cst_9 {dimension_numbers = #tpu.dot_dimension_numbers<[1], [0], [0], [1], [0, 0, 1, 1], [], []>} : vector<8x128xf32>, vector<128x128xf32>, vector<8x128xf32> -> vector<8x128xf32>
    %c1_10 = arith.constant 1 : index
    %c0_11 = arith.constant 0 : index
    %14 = vector.load %arg3[%c1_10, %c0_11] : memref<4x128xf32, #tpu.memory_space<vmem>>, vector<1x128xf32>
    %15 = vector.shape_cast %14 : vector<1x128xf32> to vector<128xf32>
    %16 = vector.shape_cast %15 : vector<128xf32> to vector<1x128xf32>
    %17 = vector.broadcast %16 : vector<1x128xf32> to vector<8x128xf32>
    %18 = arith.addf %13, %17 : vector<8x128xf32>
    %cst_12 = arith.constant 0.000000e+00 : f32
    %19 = vector.broadcast %cst_12 : f32 to vector<8x128xf32>
    %20 = arith.maximumf %18, %19 : vector<8x128xf32>
    %c2 = arith.constant 2 : index
    %c0_13 = arith.constant 0 : index
    %c0_14 = arith.constant 0 : index
    %21 = vector.load %arg2[%c2, %c0_13, %c0_14] : memref<4x128x128xf32, #tpu.memory_space<vmem>>, vector<1x128x128xf32>
    %22 = vector.shape_cast %21 : vector<1x128x128xf32> to vector<128x128xf32>
    %cst_15 = arith.constant dense<0.000000e+00> : vector<8x128xf32>
    %23 = tpu.matmul %20, %22, %cst_15 {dimension_numbers = #tpu.dot_dimension_numbers<[1], [0], [0], [1], [0, 0, 1, 1], [], []>} : vector<8x128xf32>, vector<128x128xf32>, vector<8x128xf32> -> vector<8x128xf32>
    %c2_16 = arith.constant 2 : index
    %c0_17 = arith.constant 0 : index
    %24 = vector.load %arg3[%c2_16, %c0_17] : memref<4x128xf32, #tpu.memory_space<vmem>>, vector<1x128xf32>
    %25 = vector.shape_cast %24 : vector<1x128xf32> to vector<128xf32>
    %26 = vector.shape_cast %25 : vector<128xf32> to vector<1x128xf32>
    %27 = vector.broadcast %26 : vector<1x128xf32> to vector<8x128xf32>
    %28 = arith.addf %23, %27 : vector<8x128xf32>
    %cst_18 = arith.constant 0.000000e+00 : f32
    %29 = vector.broadcast %cst_18 : f32 to vector<8x128xf32>
    %30 = arith.maximumf %28, %29 : vector<8x128xf32>
    %c3 = arith.constant 3 : index
    %c0_19 = arith.constant 0 : index
    %c0_20 = arith.constant 0 : index
    %31 = vector.load %arg2[%c3, %c0_19, %c0_20] : memref<4x128x128xf32, #tpu.memory_space<vmem>>, vector<1x128x128xf32>
    %32 = vector.shape_cast %31 : vector<1x128x128xf32> to vector<128x128xf32>
    %cst_21 = arith.constant dense<0.000000e+00> : vector<8x128xf32>
    %33 = tpu.matmul %30, %32, %cst_21 {dimension_numbers = #tpu.dot_dimension_numbers<[1], [0], [0], [1], [0, 0, 1, 1], [], []>} : vector<8x128xf32>, vector<128x128xf32>, vector<8x128xf32> -> vector<8x128xf32>
    %c3_22 = arith.constant 3 : index
    %c0_23 = arith.constant 0 : index
    %34 = vector.load %arg3[%c3_22, %c0_23] : memref<4x128xf32, #tpu.memory_space<vmem>>, vector<1x128xf32>
    %35 = vector.shape_cast %34 : vector<1x128xf32> to vector<128xf32>
    %36 = vector.shape_cast %35 : vector<128xf32> to vector<1x128xf32>
    %37 = vector.broadcast %36 : vector<1x128xf32> to vector<8x128xf32>
    %38 = arith.addf %33, %37 : vector<8x128xf32>
    %c0_24 = arith.constant 0 : index
    %c0_25 = arith.constant 0 : index
    %39 = vector.load %arg4[%c0_24, %c0_25] : memref<8x128xf32, #tpu.memory_space<vmem>>, vector<8x128xf32>
    tpu.vector_store %arg4[%c0_24, %c0_25], %38 {strides = array<i32>} : memref<8x128xf32, #tpu.memory_space<vmem>>, vector<8x128xf32>,
    return
  }
  func.func @transform_0(%arg0: i32) -> (i32, i32) {
    %c0_i32 = arith.constant 0 : i32
    %c0_i32_0 = arith.constant 0 : i32
    return %arg0, %c0_i32 : i32, i32
  }
  func.func @transform_1(%arg0: i32) -> (i32, i32, i32) {
    %c0_i32 = arith.constant 0 : i32
    %c0_i32_0 = arith.constant 0 : i32
    %c0_i32_1 = arith.constant 0 : i32
    %c0_i32_2 = arith.constant 0 : i32
    return %c0_i32, %c0_i32_0, %c0_i32_1 : i32, i32, i32
  }
  func.func @transform_2(%arg0: i32) -> (i32, i32) {
    %c0_i32 = arith.constant 0 : i32
    %c0_i32_0 = arith.constant 0 : i32
    %c0_i32_1 = arith.constant 0 : i32
    return %c0_i32, %c0_i32_0 : i32, i32
  }
  func.func @transform_3(%arg0: i32) -> (i32, i32) {
    %c0_i32 = arith.constant 0 : i32
    %c0_i32_0 = arith.constant 0 : i32
    return %arg0, %c0_i32 : i32, i32
  }
}

</mosaic_0001>

<llo_original>
// kernel: tpu_custom_call.1
$region0: #{tpu_custom_call.1}
  #allocation0 [shape = 'u32[]', space=smem, size = 0x4, offset = 0x4, fixed_abs, tag = 'smem constant byte address 0x4 - core index']
  #allocation1 [shape = 'u32[144,128]{1,0:T(1,128)}', space=vmem, size = 0x12000, scoped, tag = 'internal scratch']
  %s0 = inlined_call_operand.hbm [shape: f32[8,128], index: 0, kind: input, shape index: {}]
  %s1 = inlined_call_operand.hbm [shape: f32[4,128,128], index: 1, kind: input, shape index: {}]
  %s2 = inlined_call_operand.vmem [shape: f32[4,128], index: 2, kind: input, shape index: {}]
  %s3 = inlined_call_operand.hbm [shape: f32[8,128], index: 3, kind: output, shape index: {}]
  %s4 = sld [smem:[#allocation0]]
  $region30: #{tpu_custom_call.1} parent=0
    _
  %s6 = ssub.s32 1, %s4
  %s7 = scalar_select 0, %s6, %s4
  $region1: #{tpu_custom_call.1} parent=0
    #allocation2 [shape = 'u8[4096]{0}', space=vmem, size = 0x1000, scoped, tag = 'input window, operand 0, single buffered']
    #allocation3 [shape = 's32[1]{0}', space=sflag, size = 0x4, scoped, tag = 'scoped memory for tpu_custom_call.1']
    #allocation4 [shape = 's32[1]{0}', space=sflag, size = 0x4, scoped, tag = 'scoped memory for tpu_custom_call.1']
    #allocation5 [shape = 'u8[262144]{0}', space=vmem, size = 0x40000, scoped, tag = 'input window, operand 1, single buffered']
    #allocation6 [shape = 's32[1]{0}', space=sflag, size = 0x4, scoped, tag = 'scoped memory for tpu_custom_call.1']
    #allocation7 [shape = 'u8[4096]{0}', space=vmem, size = 0x1000, scoped, tag = 'output window, operand 0, single buffered']
    %8 = vsyncpa [#allocation3], 0
    %9 = vsyncpa [#allocation6], 0
    %10 = vsyncpa [#allocation4], 0
    // Predicated region
    $region2: #{tpu_custom_call.1} parent=1 // pred_check
      _
    $region3: #{tpu_custom_call.1} parent=1 // pred_check_branch
      %12 = sbr.rel (0) target = $region5
    $region4: #{tpu_custom_call.1} parent=1 // pred_region
      %s14 = ssub.s32 128, 128
      %15 = vsyncadd [#allocation3], %s14
      %s17 = sshll.u32 [#allocation2], 4
      %s18 = int_to_ptr.vmem [resolvable:$true] %s17
      %20 = dma.hbm_to_vmem [thread:$0]  %s0, 128, %s18, [#allocation3]
    $region5: #{tpu_custom_call.1} parent=1 // pred_fallthru
      _
    // Predicated region
    $region6: #{tpu_custom_call.1} parent=1 // pred_check
      _
    $region7: #{tpu_custom_call.1} parent=1 // pred_check_branch
      %22 = sbr.rel (0) target = $region9
    $region8: #{tpu_custom_call.1} parent=1 // pred_region
      %s24 = ssub.s32 8192, 8192
      %25 = vsyncadd [#allocation6], %s24
      %s26 = sshll.u32 [#allocation5], 4
      %s27 = int_to_ptr.vmem [resolvable:$true] %s26
      %32 = dma.hbm_to_vmem [thread:$0]  %s1, 8192, %s27, [#allocation6], 128, 128, 8
    $region9: #{tpu_custom_call.1} parent=1 // pred_fallthru
      _
    // Predicated region
    $region10: #{tpu_custom_call.1} parent=1 // pred_check
      _
    $region11: #{tpu_custom_call.1} parent=1 // pred_check_branch
      %34 = sbr.rel (0) target = $region13
    $region12: #{tpu_custom_call.1} parent=1 // pred_region
      _
    $region13: #{tpu_custom_call.1} parent=1 // pred_fallthru
      _
    // Predicated region
    $region14: #{tpu_custom_call.1} parent=1 // pred_check
      _
    $region15: #{tpu_custom_call.1} parent=1 // pred_check_branch
      %36 = sbr.rel (0) target = $region17
    $region16: #{tpu_custom_call.1} parent=1 // pred_region
      %37 = dma.done [#allocation3], 128
    $region17: #{tpu_custom_call.1} parent=1 // pred_fallthru
      _
    // Predicated region
    $region18: #{tpu_custom_call.1} parent=1 // pred_check
      _
    $region19: #{tpu_custom_call.1} parent=1 // pred_check_branch
      %39 = sbr.rel (0) target = $region21
    $region20: #{tpu_custom_call.1} parent=1 // pred_region
      %40 = dma.done [#allocation6], 8192
    $region21: #{tpu_custom_call.1} parent=1 // pred_fallthru
      _
    %v41 = vld [vmem:[#allocation2] sm:$0xff]
    %v42 = vld [vmem:[#allocation5] sm:$0xff]
    %v43 = vld [vmem:[#allocation5 + $0x8] sm:$0xff]
    %v44 = vld [vmem:[#allocation5 + $0x10] sm:$0xff]
    %v45 = vld [vmem:[#allocation5 + $0x18] sm:$0xff]
    %v46 = vld [vmem:[#allocation5 + $0x20] sm:$0xff]
    %v47 = vld [vmem:[#allocation5 + $0x28] sm:$0xff]
    %v48 = vld [vmem:[#allocation5 + $0x30] sm:$0xff]
    %v49 = vld [vmem:[#allocation5 + $0x38] sm:$0xff]
    %v50 = vld [vmem:[#allocation5 + $0x40] sm:$0xff]
    %v51 = vld [vmem:[#allocation5 + $0x48] sm:$0xff]
    %v52 = vld [vmem:[#allocation5 + $0x50] sm:$0xff]
    %v53 = vld [vmem:[#allocation5 + $0x58] sm:$0xff]
    %v54 = vld [vmem:[#allocation5 + $0x60] sm:$0xff]
    %v55 = vld [vmem:[#allocation5 + $0x68] sm:$0xff]
    %v56 = vld [vmem:[#allocation5 + $0x70] sm:$0xff]
    %v57 = vld [vmem:[#allocation5 + $0x78] sm:$0xff]
    %v58 = vld [vmem:[%s2] sm:$0x1]
    %v59 = vlaneseq
    %v60 = vshrl.u32 %v59, 7
    %v61 = vsub.s32 0, %v60
    %v62 = vrot.slane %v58, %v61
    %63 = vmatprep.subr.mxu0 0.0
    %64 = vmatpush1.msra.mxu0 %v42
    %65 = vmatprep.subr.mxu0 0.0
    %66 = vmatpush1.msra.mxu0 %v43
    %67 = vmatprep.subr.mxu0 0.0
    %68 = vmatpush1.msra.mxu0 %v44
    %69 = vmatprep.subr.mxu0 0.0
    %70 = vmatpush1.msra.mxu0 %v45
    %71 = vmatprep.subr.mxu0 0.0
    %72 = vmatpush1.msra.mxu0 %v46
    %73 = vmatprep.subr.mxu0 0.0
    %74 = vmatpush1.msra.mxu0 %v47
    %75 = vmatprep.subr.mxu0 0.0
    %76 = vmatpush1.msra.mxu0 %v48
    %77 = vmatprep.subr.mxu0 0.0
    %78 = vmatpush1.msra.mxu0 %v49
    %79 = vmatprep.subr.mxu0 0.0
    %80 = vmatpush1.msra.mxu0 %v50
    %81 = vmatprep.subr.mxu0 0.0
    %82 = vmatpush1.msra.mxu0 %v51
    %83 = vmatprep.subr.mxu0 0.0
    %84 = vmatpush1.msra.mxu0 %v52
    %85 = vmatprep.subr.mxu0 0.0
    %86 = vmatpush1.msra.mxu0 %v53
    %87 = vmatprep.subr.mxu0 0.0
    %88 = vmatpush1.msra.mxu0 %v54
    %89 = vmatprep.subr.mxu0 0.0
    %90 = vmatpush1.msra.mxu0 %v55
    %91 = vmatprep.subr.mxu0 0.0
    %92 = vmatpush1.msra.mxu0 %v56
    %93 = vmatprep.subr.mxu0 0.0
    %94 = vmatpush1.msra.mxu0 %v57
    %95 = vmatprep.subr.mxu0 0.0
    %96 = vmatpush1.msra.mxu0 0.0
    %97 = vmatprep.subr.mxu0 0.0
    %98 = vmatpush1.msra.mxu0 0.0
    %99 = vmatprep.subr.mxu0 0.0
    %100 = vmatpush1.msra.mxu0 0.0
    %101 = vmatprep.subr.mxu0 0.0
    %102 = vmatpush1.msra.mxu0 0.0
    %103 = vmatprep.subr.mxu0 0.0
    %104 = vmatpush1.msra.mxu0 0.0
    %105 = vmatprep.subr.mxu0 0.0
    %106 = vmatpush1.msra.mxu0 0.0
    %107 = vmatprep.subr.mxu0 0.0
    %108 = vmatpush1.msra.mxu0 0.0
    %109 = vmatprep.subr.mxu0 0.0
    %110 = vmatpush1.msra.mxu0 0.0
    %111 = vmatprep.subr.mxu0 0.0
    %112 = vmatpush1.msra.mxu0 0.0
    %113 = vmatprep.subr.mxu0 0.0
    %114 = vmatpush1.msra.mxu0 0.0
    %115 = vmatprep.subr.mxu0 0.0
    %116 = vmatpush1.msra.mxu0 0.0
    %117 = vmatprep.subr.mxu0 0.0
    %118 = vmatpush1.msra.mxu0 0.0
    %119 = vmatprep.subr.mxu0 0.0
    %120 = vmatpush1.msra.mxu0 0.0
    %121 = vmatprep.subr.mxu0 0.0
    %122 = vmatpush1.msra.mxu0 0.0
    %123 = vmatprep.subr.mxu0 0.0
    %124 = vmatpush1.msra.mxu0 0.0
    %125 = vmatprep.subr.mxu0 0.0
    %126 = vmatpush1.msra.mxu0 0.0
    %127 = vmatprep.mubr.f32.mxu0 0.0
    %128 = vmatmul.mubr.f32.gmra.mrb[0].mxu0 %v41
    %v129 = vpop.f32.mrb[0].mxu0
    %v130 = vadd.f32 %v62, %v129
    %v131 = vpop.f32.mrb[0].mxu0
    %132 = vdwg.mxu0
    %v133 = vmax.f32 %v130, 0.0
    %s134 = scalar_lea.vmem [#allocation5], 128
    %v135 = vld [vmem:[%s134] sm:$0xff]
    %v136 = vld [vmem:[%s134 + $0x8] sm:$0xff]
    %v137 = vld [vmem:[%s134 + $0x10] sm:$0xff]
    %v138 = vld [vmem:[%s134 + $0x18] sm:$0xff]
    %v139 = vld [vmem:[%s134 + $0x20] sm:$0xff]
    %v140 = vld [vmem:[%s134 + $0x28] sm:$0xff]
    %v141 = vld [vmem:[%s134 + $0x30] sm:$0xff]
    %v142 = vld [vmem:[%s134 + $0x38] sm:$0xff]
    %v143 = vld [vmem:[%s134 + $0x40] sm:$0xff]
    %v144 = vld [vmem:[%s134 + $0x48] sm:$0xff]
    %v145 = vld [vmem:[%s134 + $0x50] sm:$0xff]
    %v146 = vld [vmem:[%s134 + $0x58] sm:$0xff]
    %v147 = vld [vmem:[%s134 + $0x60] sm:$0xff]
    %v148 = vld [vmem:[%s134 + $0x68] sm:$0xff]
    %v149 = vld [vmem:[%s134 + $0x70] sm:$0xff]
    %v150 = vld [vmem:[%s134 + $0x78] sm:$0xff]
    %v151 = vld [vmem:[%s2 + $0x1] sm:$0x1]
    %v152 = vlaneseq
    %v153 = vshrl.u32 %v152, 7
    %v154 = vsub.s32 0, %v153
    %v155 = vrot.slane %v151, %v154
    %156 = vmatprep.subr.mxu0 0.0
    %157 = vmatpush1.msra.mxu0 %v135
    %158 = vmatprep.subr.mxu0 0.0
    %159 = vmatpush1.msra.mxu0 %v136
    %160 = vmatprep.subr.mxu0 0.0
    %161 = vmatpush1.msra.mxu0 %v137
    %162 = vmatprep.subr.mxu0 0.0
    %163 = vmatpush1.msra.mxu0 %v138
    %164 = vmatprep.subr.mxu0 0.0
    %165 = vmatpush1.msra.mxu0 %v139
    %166 = vmatprep.subr.mxu0 0.0
    %167 = vmatpush1.msra.mxu0 %v140
    %168 = vmatprep.subr.mxu0 0.0
    %169 = vmatpush1.msra.mxu0 %v141
    %170 = vmatprep.subr.mxu0 0.0
    %171 = vmatpush1.msra.mxu0 %v142
    %172 = vmatprep.subr.mxu0 0.0
    %173 = vmatpush1.msra.mxu0 %v143
    %174 = vmatprep.subr.mxu0 0.0
    %175 = vmatpush1.msra.mxu0 %v144
    %176 = vmatprep.subr.mxu0 0.0
    %177 = vmatpush1.msra.mxu0 %v145
    %178 = vmatprep.subr.mxu0 0.0
    %179 = vmatpush1.msra.mxu0 %v146
    %180 = vmatprep.subr.mxu0 0.0
    %181 = vmatpush1.msra.mxu0 %v147
    %182 = vmatprep.subr.mxu0 0.0
    %183 = vmatpush1.msra.mxu0 %v148
    %184 = vmatprep.subr.mxu0 0.0
    %185 = vmatpush1.msra.mxu0 %v149
    %186 = vmatprep.subr.mxu0 0.0
    %187 = vmatpush1.msra.mxu0 %v150
    %188 = vmatprep.subr.mxu0 0.0
    %189 = vmatpush1.msra.mxu0 0.0
    %190 = vmatprep.subr.mxu0 0.0
    %191 = vmatpush1.msra.mxu0 0.0
    %192 = vmatprep.subr.mxu0 0.0
    %193 = vmatpush1.msra.mxu0 0.0
    %194 = vmatprep.subr.mxu0 0.0
    %195 = vmatpush1.msra.mxu0 0.0
    %196 = vmatprep.subr.mxu0 0.0
    %197 = vmatpush1.msra.mxu0 0.0
    %198 = vmatprep.subr.mxu0 0.0
    %199 = vmatpush1.msra.mxu0 0.0
    %200 = vmatprep.subr.mxu0 0.0
    %201 = vmatpush1.msra.mxu0 0.0
    %202 = vmatprep.subr.mxu0 0.0
    %203 = vmatpush1.msra.mxu0 0.0
    %204 = vmatprep.subr.mxu0 0.0
    %205 = vmatpush1.msra.mxu0 0.0
    %206 = vmatprep.subr.mxu0 0.0
    %207 = vmatpush1.msra.mxu0 0.0
    %208 = vmatprep.subr.mxu0 0.0
    %209 = vmatpush1.msra.mxu0 0.0
    %210 = vmatprep.subr.mxu0 0.0
    %211 = vmatpush1.msra.mxu0 0.0
    %212 = vmatprep.subr.mxu0 0.0
    %213 = vmatpush1.msra.mxu0 0.0
    %214 = vmatprep.subr.mxu0 0.0
    %215 = vmatpush1.msra.mxu0 0.0
    %216 = vmatprep.subr.mxu0 0.0
    %217 = vmatpush1.msra.mxu0 0.0
    %218 = vmatprep.subr.mxu0 0.0
    %219 = vmatpush1.msra.mxu0 0.0
    %220 = vmatprep.mubr.f32.mxu0 0.0
    %221 = vmatmul.mubr.f32.gmra.mrb[0].mxu0 %v133
    %v222 = vpop.f32.mrb[0].mxu0
    %v223 = vadd.f32 %v155, %v222
    %v224 = vpop.f32.mrb[0].mxu0
    %225 = vdwg.mxu0
    %v226 = vmax.f32 %v223, 0.0
    %s227 = scalar_lea.vmem [#allocation5], 256
    %v228 = vld [vmem:[%s227] sm:$0xff]
    %v229 = vld [vmem:[%s227 + $0x8] sm:$0xff]
    %v230 = vld [vmem:[%s227 + $0x10] sm:$0xff]
    %v231 = vld [vmem:[%s227 + $0x18] sm:$0xff]
    %v232 = vld [vmem:[%s227 + $0x20] sm:$0xff]
    %v233 = vld [vmem:[%s227 + $0x28] sm:$0xff]
    %v234 = vld [vmem:[%s227 + $0x30] sm:$0xff]
    %v235 = vld [vmem:[%s227 + $0x38] sm:$0xff]
    %v236 = vld [vmem:[%s227 + $0x40] sm:$0xff]
    %v237 = vld [vmem:[%s227 + $0x48] sm:$0xff]
    %v238 = vld [vmem:[%s227 + $0x50] sm:$0xff]
    %v239 = vld [vmem:[%s227 + $0x58] sm:$0xff]
    %v240 = vld [vmem:[%s227 + $0x60] sm:$0xff]
    %v241 = vld [vmem:[%s227 + $0x68] sm:$0xff]
    %v242 = vld [vmem:[%s227 + $0x70] sm:$0xff]
    %v243 = vld [vmem:[%s227 + $0x78] sm:$0xff]
    %v244 = vld [vmem:[%s2 + $0x2] sm:$0x1]
    %v245 = vlaneseq
    %v246 = vshrl.u32 %v245, 7
    %v247 = vsub.s32 0, %v246
    %v248 = vrot.slane %v244, %v247
    %249 = vmatprep.subr.mxu0 0.0
    %250 = vmatpush1.msra.mxu0 %v228
    %251 = vmatprep.subr.mxu0 0.0
    %252 = vmatpush1.msra.mxu0 %v229
    %253 = vmatprep.subr.mxu0 0.0
    %254 = vmatpush1.msra.mxu0 %v230
    %255 = vmatprep.subr.mxu0 0.0
    %256 = vmatpush1.msra.mxu0 %v231
    %257 = vmatprep.subr.mxu0 0.0
    %258 = vmatpush1.msra.mxu0 %v232
    %259 = vmatprep.subr.mxu0 0.0
    %260 = vmatpush1.msra.mxu0 %v233
    %261 = vmatprep.subr.mxu0 0.0
    %262 = vmatpush1.msra.mxu0 %v234
    %263 = vmatprep.subr.mxu0 0.0
    %264 = vmatpush1.msra.mxu0 %v235
    %265 = vmatprep.subr.mxu0 0.0
    %266 = vmatpush1.msra.mxu0 %v236
    %267 = vmatprep.subr.mxu0 0.0
    %268 = vmatpush1.msra.mxu0 %v237
    %269 = vmatprep.subr.mxu0 0.0
    %270 = vmatpush1.msra.mxu0 %v238
    %271 = vmatprep.subr.mxu0 0.0
    %272 = vmatpush1.msra.mxu0 %v239
    %273 = vmatprep.subr.mxu0 0.0
    %274 = vmatpush1.msra.mxu0 %v240
    %275 = vmatprep.subr.mxu0 0.0
    %276 = vmatpush1.msra.mxu0 %v241
    %277 = vmatprep.subr.mxu0 0.0
    %278 = vmatpush1.msra.mxu0 %v242
    %279 = vmatprep.subr.mxu0 0.0
    %280 = vmatpush1.msra.mxu0 %v243
    %281 = vmatprep.subr.mxu0 0.0
    %282 = vmatpush1.msra.mxu0 0.0
    %283 = vmatprep.subr.mxu0 0.0
    %284 = vmatpush1.msra.mxu0 0.0
    %285 = vmatprep.subr.mxu0 0.0
    %286 = vmatpush1.msra.mxu0 0.0
    %287 = vmatprep.subr.mxu0 0.0
    %288 = vmatpush1.msra.mxu0 0.0
    %289 = vmatprep.subr.mxu0 0.0
    %290 = vmatpush1.msra.mxu0 0.0
    %291 = vmatprep.subr.mxu0 0.0
    %292 = vmatpush1.msra.mxu0 0.0
    %293 = vmatprep.subr.mxu0 0.0
    %294 = vmatpush1.msra.mxu0 0.0
    %295 = vmatprep.subr.mxu0 0.0
    %296 = vmatpush1.msra.mxu0 0.0
    %297 = vmatprep.subr.mxu0 0.0
    %298 = vmatpush1.msra.mxu0 0.0
    %299 = vmatprep.subr.mxu0 0.0
    %300 = vmatpush1.msra.mxu0 0.0
    %301 = vmatprep.subr.mxu0 0.0
    %302 = vmatpush1.msra.mxu0 0.0
    %303 = vmatprep.subr.mxu0 0.0
    %304 = vmatpush1.msra.mxu0 0.0
    %305 = vmatprep.subr.mxu0 0.0
    %306 = vmatpush1.msra.mxu0 0.0
    %307 = vmatprep.subr.mxu0 0.0
    %308 = vmatpush1.msra.mxu0 0.0
    %309 = vmatprep.subr.mxu0 0.0
    %310 = vmatpush1.msra.mxu0 0.0
    %311 = vmatprep.subr.mxu0 0.0
    %312 = vmatpush1.msra.mxu0 0.0
    %313 = vmatprep.mubr.f32.mxu0 0.0
    %314 = vmatmul.mubr.f32.gmra.mrb[0].mxu0 %v226
    %v315 = vpop.f32.mrb[0].mxu0
    %v316 = vadd.f32 %v248, %v315
    %v317 = vpop.f32.mrb[0].mxu0
    %318 = vdwg.mxu0
    %v319 = vmax.f32 %v316, 0.0
    %s320 = scalar_lea.vmem [#allocation5], 384
    %v321 = vld [vmem:[%s320] sm:$0xff]
    %v322 = vld [vmem:[%s320 + $0x8] sm:$0xff]
    %v323 = vld [vmem:[%s320 + $0x10] sm:$0xff]
    %v324 = vld [vmem:[%s320 + $0x18] sm:$0xff]
    %v325 = vld [vmem:[%s320 + $0x20] sm:$0xff]
    %v326 = vld [vmem:[%s320 + $0x28] sm:$0xff]
    %v327 = vld [vmem:[%s320 + $0x30] sm:$0xff]
    %v328 = vld [vmem:[%s320 + $0x38] sm:$0xff]
    %v329 = vld [vmem:[%s320 + $0x40] sm:$0xff]
    %v330 = vld [vmem:[%s320 + $0x48] sm:$0xff]
    %v331 = vld [vmem:[%s320 + $0x50] sm:$0xff]
    %v332 = vld [vmem:[%s320 + $0x58] sm:$0xff]
    %v333 = vld [vmem:[%s320 + $0x60] sm:$0xff]
    %v334 = vld [vmem:[%s320 + $0x68] sm:$0xff]
    %v335 = vld [vmem:[%s320 + $0x70] sm:$0xff]
    %v336 = vld [vmem:[%s320 + $0x78] sm:$0xff]
    %v337 = vld [vmem:[%s2 + $0x3] sm:$0x1]
    %v338 = vlaneseq
    %v339 = vshrl.u32 %v338, 7
    %v340 = vsub.s32 0, %v339
    %v341 = vrot.slane %v337, %v340
    %342 = vmatprep.subr.mxu0 0.0
    %343 = vmatpush1.msra.mxu0 %v321
    %344 = vmatprep.subr.mxu0 0.0
    %345 = vmatpush1.msra.mxu0 %v322
    %346 = vmatprep.subr.mxu0 0.0
    %347 = vmatpush1.msra.mxu0 %v323
    %348 = vmatprep.subr.mxu0 0.0
    %349 = vmatpush1.msra.mxu0 %v324
    %350 = vmatprep.subr.mxu0 0.0
    %351 = vmatpush1.msra.mxu0 %v325
    %352 = vmatprep.subr.mxu0 0.0
    %353 = vmatpush1.msra.mxu0 %v326
    %354 = vmatprep.subr.mxu0 0.0
    %355 = vmatpush1.msra.mxu0 %v327
    %356 = vmatprep.subr.mxu0 0.0
    %357 = vmatpush1.msra.mxu0 %v328
    %358 = vmatprep.subr.mxu0 0.0
    %359 = vmatpush1.msra.mxu0 %v329
    %360 = vmatprep.subr.mxu0 0.0
    %361 = vmatpush1.msra.mxu0 %v330
    %362 = vmatprep.subr.mxu0 0.0
    %363 = vmatpush1.msra.mxu0 %v331
    %364 = vmatprep.subr.mxu0 0.0
    %365 = vmatpush1.msra.mxu0 %v332
    %366 = vmatprep.subr.mxu0 0.0
    %367 = vmatpush1.msra.mxu0 %v333
    %368 = vmatprep.subr.mxu0 0.0
    %369 = vmatpush1.msra.mxu0 %v334
    %370 = vmatprep.subr.mxu0 0.0
    %371 = vmatpush1.msra.mxu0 %v335
    %372 = vmatprep.subr.mxu0 0.0
    %373 = vmatpush1.msra.mxu0 %v336
    %374 = vmatprep.subr.mxu0 0.0
    %375 = vmatpush1.msra.mxu0 0.0
    %376 = vmatprep.subr.mxu0 0.0
    %377 = vmatpush1.msra.mxu0 0.0
    %378 = vmatprep.subr.mxu0 0.0
    %379 = vmatpush1.msra.mxu0 0.0
    %380 = vmatprep.subr.mxu0 0.0
    %381 = vmatpush1.msra.mxu0 0.0
    %382 = vmatprep.subr.mxu0 0.0
    %383 = vmatpush1.msra.mxu0 0.0
    %384 = vmatprep.subr.mxu0 0.0
    %385 = vmatpush1.msra.mxu0 0.0
    %386 = vmatprep.subr.mxu0 0.0
    %387 = vmatpush1.msra.mxu0 0.0
    %388 = vmatprep.subr.mxu0 0.0
    %389 = vmatpush1.msra.mxu0 0.0
    %390 = vmatprep.subr.mxu0 0.0
    %391 = vmatpush1.msra.mxu0 0.0
    %392 = vmatprep.subr.mxu0 0.0
    %393 = vmatpush1.msra.mxu0 0.0
    %394 = vmatprep.subr.mxu0 0.0
    %395 = vmatpush1.msra.mxu0 0.0
    %396 = vmatprep.subr.mxu0 0.0
    %397 = vmatpush1.msra.mxu0 0.0
    %398 = vmatprep.subr.mxu0 0.0
    %399 = vmatpush1.msra.mxu0 0.0
    %400 = vmatprep.subr.mxu0 0.0
    %401 = vmatpush1.msra.mxu0 0.0
    %402 = vmatprep.subr.mxu0 0.0
    %403 = vmatpush1.msra.mxu0 0.0
    %404 = vmatprep.subr.mxu0 0.0
    %405 = vmatpush1.msra.mxu0 0.0
    %406 = vmatprep.mubr.f32.mxu0 0.0
    %407 = vmatmul.mubr.f32.gmra.mrb[0].mxu0 %v319
    %v408 = vpop.f32.mrb[0].mxu0
    %v409 = vadd.f32 %v341, %v408
    %v410 = vpop.f32.mrb[0].mxu0
    %411 = vdwg.mxu0
    %412 = vst [vmem:[#allocation7] sm:$0xff] %v409
    // Predicated region
    $region22: #{tpu_custom_call.1} parent=1 // pred_check
      _
    $region23: #{tpu_custom_call.1} parent=1 // pred_check_branch
      %414 = sbr.rel (0) target = $region25
    $region24: #{tpu_custom_call.1} parent=1 // pred_region
      %s416 = ssub.s32 128, 128
      %417 = vsyncadd [#allocation4], %s416
      %s419 = sshll.u32 [#allocation7], 4
      %s420 = int_to_ptr.vmem [resolvable:$true] %s419
      %422 = dma.vmem_to_hbm [thread:$0]  %s420, 128, %s3, [#allocation4]
    $region25: #{tpu_custom_call.1} parent=1 // pred_fallthru
      _
    // Predicated region
    $region26: #{tpu_custom_call.1} parent=1 // pred_check
      _
    $region27: #{tpu_custom_call.1} parent=1 // pred_check_branch
      %424 = sbr.rel (0) target = $region29
    $region28: #{tpu_custom_call.1} parent=1 // pred_region
      %425 = dma.done [#allocation4], 128
    $region29: #{tpu_custom_call.1} parent=1 // pred_fallthru
      _
    %426 = vsyncpa [#allocation3], 1
    %427 = vsyncpa [#allocation6], 1
    %428 = vsyncpa [#allocation4], 1

</llo_original>
